<compile_context>
chip_gen: v5e
topology: v5e:2x2
jax: 0.10.0
libtpu: 0.0.40
codegen_flags: <defaults>
</compile_context>

<pallas_src>
import math
import functools
import jax
import jax.numpy as jnp
from jax.experimental import pallas as pl
from jax.experimental.pallas import tpu as pltpu


# ----------------------------------------------------------------------------
# Small helpers
# ----------------------------------------------------------------------------

def _row_tile(rows, max_tile=512):
    """Largest row tile that divides `rows`, is a multiple of 8, and <= max_tile."""
    if rows % 8 != 0:
        return rows
    t = min(rows, max_tile)
    t -= t % 8
    while rows % t != 0:
        t -= 8
    return t


def _erf_poly(z):
    # Abramowitz & Stegun 7.1.26 (|err| <= 1.5e-7, i.e. float32-exact in practice).
    # TODO(synk): exact lax.erf lowering in Mosaic is not guaranteed; this polynomial
    # keeps exact-GELU semantics to within f32 rounding while staying in-kernel.
    a1, a2, a3, a4, a5 = 0.254829592, -0.284496736, 1.421413741, -1.453152027, 1.061405429
    p = 0.3275911
    za = jnp.abs(z)
    t = 1.0 / (1.0 + p * za)
    poly = ((((a5 * t + a4) * t + a3) * t + a2) * t + a1) * t
    y = 1.0 - poly * jnp.exp(-za * za)
    return jnp.where(z >= 0.0, y, -y)


def _gelu_exact(x):
    # matches nn.GELU() (erf form) up to ~1e-7
    return 0.5 * x * (1.0 + _erf_poly(x * (1.0 / math.sqrt(2.0))))


# ----------------------------------------------------------------------------
# Pallas kernels
# ----------------------------------------------------------------------------

def _ln_qkv_kernel(x_ref, g_ref, b_ref, w_ref, bias_ref, o_ref):
    # Fused: LayerNorm(x) @ Wqkv + bqkv.   x: (TR, D); w: (D, 3*inner)
    x = x_ref[...]
    mean = jnp.mean(x, axis=-1, keepdims=True)
    var = jnp.mean((x - mean) ** 2, axis=-1, keepdims=True)      # biased (torch LayerNorm)
    y = (x - mean) * jax.lax.rsqrt(var + 1e-5) * g_ref[...] + b_ref[...]
    o_ref[...] = jnp.dot(y, w_ref[...], preferred_element_type=jnp.float32) + bias_ref[...]


def _proj_residual_kernel(a_ref, w_ref, b_ref, r_ref, o_ref):
    # Fused: residual + attention-output projection.   a: (TR, inner); r,o: (TR, D)
    o_ref[...] = (r_ref[...]
                  + jnp.dot(a_ref[...], w_ref[...], preferred_element_type=jnp.float32)
                  + b_ref[...])


def _ffn_kernel(x_ref, g_ref, b_ref, w1_ref, b1_ref, w2_ref, b2_ref, o_ref):
    # Fused: x + W2(GELU(W1(LN(x)))).  Hidden (TR, 4*D) stays in VMEM/vregs.
    x = x_ref[...]
    mean = jnp.mean(x, axis=-1, keepdims=True)
    var = jnp.mean((x - mean) ** 2, axis=-1, keepdims=True)
    y = (x - mean) * jax.lax.rsqrt(var + 1e-5) * g_ref[...] + b_ref[...]
    h = jnp.dot(y, w1_ref[...], preferred_element_type=jnp.float32) + b1_ref[...]
    h = _gelu_exact(h)
    ff = jnp.dot(h, w2_ref[...], preferred_element_type=jnp.float32) + b2_ref[...]
    o_ref[...] = x + ff


def _performer_attn_kernel(qkv_ref, p_ref, o_ref, *, heads, dim_head, eps):
    # One batch element per grid step; all heads processed in-kernel (lane-dense store).
    # qkv block: (1, N, 3*inner) laid out [q(h d) | k(h d) | v(h d)];
    # p_ref: (M, Dh) projection pre-scaled by data_normalizer; out block: (1, N, inner).
    qkv = qkv_ref[0]
    proj = p_ref[...]
    d = dim_head
    inner = heads * d
    m = proj.shape[0]

    data_normalizer = float(d) ** (-0.25)
    diag_scale = 0.5 * data_normalizer * data_normalizer
    ratio = float(m) ** (-0.5)

    outs = []
    for h in range(heads):                                  # static unroll over heads
        q = qkv[:, h * d:(h + 1) * d]                       # (N, Dh)
        k = qkv[:, inner + h * d: inner + (h + 1) * d]
        v = qkv[:, 2 * inner + h * d: 2 * inner + (h + 1) * d]

        # softmax_kernel: data_dash = (normalizer * data) @ proj^T  (normalizer folded
        # into proj at init)
        qd = jax.lax.dot_general(q, proj, dimension_numbers=(((1,), (1,)), ((), ())),
                                 preferred_element_type=jnp.float32)      # (N, M)
        kd = jax.lax.dot_general(k, proj, dimension_numbers=(((1,), (1,)), ((), ())),
                                 preferred_element_type=jnp.float32)      # (N, M)

        q_diag = jnp.sum(q * q, axis=-1, keepdims=True) * diag_scale      # (N, 1)
        k_diag = jnp.sum(k * k, axis=-1, keepdims=True) * diag_scale      # (N, 1)

        # query: per-row max; key: per-(batch, head) max over (seq, features)
        q_prime = ratio * (jnp.exp(qd - q_diag - jnp.max(qd, axis=-1, keepdims=True)) + eps)
        k_prime = ratio * (jnp.exp(kd - k_diag - jnp.max(kd, axis=(0, 1), keepdims=True)) + eps)

        # non-causal linear_attention
        k_sum = jnp.sum(k_prime, axis=0, keepdims=True)                   # (1, M)
        d_inv = 1.0 / jnp.sum(q_prime * k_sum, axis=-1, keepdims=True)    # (N, 1) exact divide
        context = jax.lax.dot_general(k_prime, v,
                                      dimension_numbers=(((0,), (0,)), ((), ())),
                                      preferred_element_type=jnp.float32)  # (M, Dh)
        outs.append(jnp.dot(q_prime, context, preferred_element_type=jnp.float32) * d_inv)

    o_ref[0] = jnp.concatenate(outs, axis=-1)               # (N, H*Dh) single wide store


# ----------------------------------------------------------------------------
# pallas_call wrappers
# ----------------------------------------------------------------------------

_PARALLEL_1D = pltpu.CompilerParams(dimension_semantics=("parallel",))


def ln_qkv(x2d, gamma, beta, wqkv, bqkv):
    R, D = x2d.shape
    Dout = wqkv.shape[1]
    tr = _row_tile(R)
    # TODO(synk): for realistic D (>=512) add a K grid axis with a VMEM f32 accumulator.
    return pl.pallas_call(
        _ln_qkv_kernel,
        out_shape=jax.ShapeDtypeStruct((R, Dout), jnp.float32),
        grid=(R // tr,),
        in_specs=[pl.BlockSpec((tr, D), lambda i: (i, 0)),
                  pl.BlockSpec((1, D), lambda i: (0, 0)),
                  pl.BlockSpec((1, D), lambda i: (0, 0)),
                  pl.BlockSpec((D, Dout), lambda i: (0, 0)),
                  pl.BlockSpec((1, Dout), lambda i: (0, 0))],
        out_specs=pl.BlockSpec((tr, Dout), lambda i: (i, 0)),
        compiler_params=_PARALLEL_1D,
    )(x2d, gamma.reshape(1, D), beta.reshape(1, D), wqkv, bqkv.reshape(1, Dout))


def proj_residual(attn2d, wo, bo, residual2d):
    R, Din = attn2d.shape
    Dout = wo.shape[1]
    tr = _row_tile(R)
    return pl.pallas_call(
        _proj_residual_kernel,
        out_shape=jax.ShapeDtypeStruct((R, Dout), jnp.float32),
        grid=(R // tr,),
        in_specs=[pl.BlockSpec((tr, Din), lambda i: (i, 0)),
                  pl.BlockSpec((Din, Dout), lambda i: (0, 0)),
                  pl.BlockSpec((1, Dout), lambda i: (0, 0)),
                  pl.BlockSpec((tr, Dout), lambda i: (i, 0))],
        out_specs=pl.BlockSpec((tr, Dout), lambda i: (i, 0)),
        compiler_params=_PARALLEL_1D,
    )(attn2d, wo, bo.reshape(1, Dout), residual2d)


def ffn_residual(x2d, gamma, beta, w1, b1, w2, b2):
    R, D = x2d.shape
    H = w1.shape[1]
    tr = _row_tile(R)
    return pl.pallas_call(
        _ffn_kernel,
        out_shape=jax.ShapeDtypeStruct((R, D), jnp.float32),
        grid=(R // tr,),
        in_specs=[pl.BlockSpec((tr, D), lambda i: (i, 0)),
                  pl.BlockSpec((1, D), lambda i: (0, 0)),
                  pl.BlockSpec((1, D), lambda i: (0, 0)),
                  pl.BlockSpec((D, H), lambda i: (0, 0)),
                  pl.BlockSpec((1, H), lambda i: (0, 0)),
                  pl.BlockSpec((H, D), lambda i: (0, 0)),
                  pl.BlockSpec((1, D), lambda i: (0, 0))],
        out_specs=pl.BlockSpec((tr, D), lambda i: (i, 0)),
        compiler_params=_PARALLEL_1D,
    )(x2d, gamma.reshape(1, D), beta.reshape(1, D), w1, b1.reshape(1, H), w2, b2.reshape(1, D))


def performer_attention(qkv, proj_scaled, heads, dim_head):
    # qkv: (B, N, 3*inner) in [q|k|v] order; proj_scaled: (M, Dh) (data_normalizer folded in)
    b, n, three_inner = qkv.shape
    inner = heads * dim_head
    m = proj_scaled.shape[0]
    kernel = functools.partial(_performer_attn_kernel,
                               heads=heads, dim_head=dim_head, eps=1e-4)
    return pl.pallas_call(
        kernel,
        out_shape=jax.ShapeDtypeStruct((b, n, inner), jnp.float32),
        grid=(b,),
        in_specs=[pl.BlockSpec((1, n, three_inner), lambda i: (i, 0, 0)),
                  pl.BlockSpec((m, dim_head), lambda i: (0, 0))],
        out_specs=pl.BlockSpec((1, n, inner), lambda i: (i, 0, 0)),
        compiler_params=_PARALLEL_1D,
    )(qkv, proj_scaled)


# ----------------------------------------------------------------------------
# Parameter construction (deterministic, in-script)
# ----------------------------------------------------------------------------

def gaussian_orthogonal_random_matrix(key, nb_rows, nb_cols):
    # Mirrors gaussian_orthogonal_random_matrix(scaling=0) from the PyTorch code.
    nb_full_blocks = nb_rows // nb_cols
    keys = jax.random.split(key, nb_full_blocks + 2)
    blocks = []
    for i in range(nb_full_blocks):
        g = jax.random.normal(keys[i], (nb_cols, nb_cols), jnp.float32)
        qmat, _ = jnp.linalg.qr(g)
        blocks.append(qmat.T)
    rem = nb_rows - nb_full_blocks * nb_cols
    if rem > 0:
        g = jax.random.normal(keys[nb_full_blocks], (nb_cols, nb_cols), jnp.float32)
        qmat, _ = jnp.linalg.qr(g)
        blocks.append(qmat.T[:rem])
    final = jnp.concatenate(blocks, axis=0)
    multiplier = jnp.linalg.norm(
        jax.random.normal(keys[-1], (nb_rows, nb_cols), jnp.float32), axis=1)
    return multiplier[:, None] * final


def init_params(key, dim, depth, heads, dim_head, ff_mult, nb_features):
    inner = heads * dim_head
    hidden = dim * ff_mult
    data_normalizer = float(dim_head) ** (-0.25)
    layers = []
    for _ in range(depth):
        key, *ks = jax.random.split(key, 14)
        kit = iter(ks)

        def lin(din, dout):
            bound = 1.0 / math.sqrt(din)
            w = jax.random.uniform(next(kit), (din, dout), jnp.float32, -bound, bound)
            bb = jax.random.uniform(next(kit), (dout,), jnp.float32, -bound, bound)
            return w, bb

        wq, bq = lin(dim, inner)
        wk, bk = lin(dim, inner)
        wv, bv = lin(dim, inner)
        wo, bo = lin(inner, dim)
        w1, b1 = lin(dim, hidden)
        w2, b2 = lin(hidden, dim)
        key, pkey = jax.random.split(key)
        proj = gaussian_orthogonal_random_matrix(pkey, nb_features, dim_head)
        layers.append(dict(
            ln1_g=jnp.ones((dim,), jnp.float32), ln1_b=jnp.zeros((dim,), jnp.float32),
            ln2_g=jnp.ones((dim,), jnp.float32), ln2_b=jnp.zeros((dim,), jnp.float32),
            wqkv=jnp.concatenate([wq, wk, wv], axis=1),        # (dim, 3*inner)
            bqkv=jnp.concatenate([bq, bk, bv], axis=0),        # (3*inner,)
            wo=wo, bo=bo, w1=w1, b1=b1, w2=w2, b2=b2,
            proj_scaled=proj * data_normalizer))               # fold data_normalizer
    return layers


# ----------------------------------------------------------------------------
# Performer forward (SequentialSequence: x = x + attn(LN(x)); x = x + ff(LN(x)))
# ----------------------------------------------------------------------------

def performer_forward(x, layers, heads, dim_head):
    b, n, dim = x.shape
    x2d = x.reshape(b * n, dim)
    for p in layers:
        # ---- self-attention block (LN + fused QKV -> head-batched FAVOR+ -> out-proj + residual)
        qkv = ln_qkv(x2d, p["ln1_g"], p["ln1_b"], p["wqkv"], p["bqkv"])       # (B*N, 3*inner)
        attn = performer_attention(qkv.reshape(b, n, -1), p["proj_scaled"],
                                   heads, dim_head)                           # (B, N, inner)
        x2d = proj_residual(attn.reshape(b * n, -1), p["wo"], p["bo"], x2d)   # (B*N, dim)

        # ---- feed-forward block (LN + W1 + exact GELU + W2 + residual, fully fused)
        x2d = ffn_residual(x2d, p["ln2_g"], p["ln2_b"],
                           p["w1"], p["b1"], p["w2"], p["b2"])                # (B*N, dim)
    return x2d.reshape(b, n, dim)


# ----------------------------------------------------------------------------
# Main
# ----------------------------------------------------------------------------

if __name__ == "__main__":
    B, N, DIM = 2, 8, 32
    DEPTH, HEADS, DIM_HEAD, FF_MULT = 2, 4, 8, 4
    NB_FEATURES = int(DIM_HEAD * math.log(DIM_HEAD))   # default nb_features = 16

    key = jax.random.PRNGKey(0)
    key, xk, pk = jax.random.split(key, 3)
    x = jax.random.normal(xk, (B, N, DIM), jnp.float32)
    layers = init_params(pk, DIM, DEPTH, HEADS, DIM_HEAD, FF_MULT, NB_FEATURES)

    out = performer_forward(x, layers, HEADS, DIM_HEAD)
    out = jax.block_until_ready(out)
    assert out.shape == (B, N, DIM), out.shape
    assert bool(jnp.all(jnp.isfinite(out)))
    print("KERNEL_OK")
</pallas_src>

<mosaic_0001>
module attributes {stable_mosaic.version = 11 : i64} {
  func.func @_ln_qkv_kernel(%arg0: i32, %arg1: memref<16x32xf32, #tpu.memory_space<vmem>>, %arg2: memref<1x32xf32, #tpu.memory_space<vmem>>, %arg3: memref<1x32xf32, #tpu.memory_space<vmem>>, %arg4: memref<32x96xf32, #tpu.memory_space<vmem>>, %arg5: memref<1x96xf32, #tpu.memory_space<vmem>>, %arg6: memref<16x96xf32, #tpu.memory_space<vmem>>) attributes {dimension_semantics = [#tpu.dimension_semantics<parallel>], iteration_bounds = array<i64: 1>, scalar_prefetch = 0 : i64, scratch_operands = 0 : i64, tpu.core_type = #tpu.core_type<tc>, window_params = [{transform_indices = @transform_0, window_bounds = array<i64: 16, 32>}, {pipeline_mode = #tpu.pipeline_mode<synchronous>, transform_indices = @transform_1, window_bounds = array<i64: 1, 32>}, {pipeline_mode = #tpu.pipeline_mode<synchronous>, transform_indices = @transform_2, window_bounds = array<i64: 1, 32>}, {pipeline_mode = #tpu.pipeline_mode<synchronous>, transform_indices = @transform_3, window_bounds = array<i64: 32, 96>}, {pipeline_mode = #tpu.pipeline_mode<synchronous>, transform_indices = @transform_4, window_bounds = array<i64: 1, 96>}, {transform_indices = @transform_5, window_bounds = array<i64: 16, 96>}]} {
    %c0 = arith.constant 0 : index
    %c0_0 = arith.constant 0 : index
    %0 = vector.load %arg1[%c0, %c0_0] : memref<16x32xf32, #tpu.memory_space<vmem>>, vector<16x32xf32>
    %cst = arith.constant dense<0.000000e+00> : vector<16xf32>
    %1 = vector.multi_reduction <add>, %0, %cst [1] : vector<16x32xf32> to vector<16xf32>
    %2 = vector.shape_cast %1 : vector<16xf32> to vector<16x1xf32>
    %cst_1 = arith.constant 3.200000e+01 : f32
    %3 = vector.broadcast %cst_1 : f32 to vector<16x1xf32>
    %4 = arith.divf %2, %3 : vector<16x1xf32>
    %5 = vector.broadcast %4 : vector<16x1xf32> to vector<16x32xf32>
    %6 = arith.subf %0, %5 : vector<16x32xf32>
    %7 = arith.mulf %6, %6 : vector<16x32xf32>
    %cst_2 = arith.constant dense<0.000000e+00> : vector<16xf32>
    %8 = vector.multi_reduction <add>, %7, %cst_2 [1] : vector<16x32xf32> to vector<16xf32>
    %9 = vector.shape_cast %8 : vector<16xf32> to vector<16x1xf32>
    %cst_3 = arith.constant 3.200000e+01 : f32
    %10 = vector.broadcast %cst_3 : f32 to vector<16x1xf32>
    %11 = arith.divf %9, %10 : vector<16x1xf32>
    %12 = vector.broadcast %4 : vector<16x1xf32> to vector<16x32xf32>
    %13 = arith.subf %0, %12 : vector<16x32xf32>
    %cst_4 = arith.constant 9.99999974E-6 : f32
    %14 = vector.broadcast %cst_4 : f32 to vector<16x1xf32>
    %15 = arith.addf %11, %14 : vector<16x1xf32>
    %16 = math.rsqrt %15 : vector<16x1xf32>
    %17 = vector.broadcast %16 : vector<16x1xf32> to vector<16x32xf32>
    %18 = arith.mulf %13, %17 : vector<16x32xf32>
    %c0_5 = arith.constant 0 : index
    %c0_6 = arith.constant 0 : index
    %19 = vector.load %arg2[%c0_5, %c0_6] : memref<1x32xf32, #tpu.memory_space<vmem>>, vector<1x32xf32>
    %20 = vector.broadcast %19 : vector<1x32xf32> to vector<16x32xf32>
    %21 = arith.mulf %18, %20 : vector<16x32xf32>
    %c0_7 = arith.constant 0 : index
    %c0_8 = arith.constant 0 : index
    %22 = vector.load %arg3[%c0_7, %c0_8] : memref<1x32xf32, #tpu.memory_space<vmem>>, vector<1x32xf32>
    %23 = vector.broadcast %22 : vector<1x32xf32> to vector<16x32xf32>
    %24 = arith.addf %21, %23 : vector<16x32xf32>
    %c0_9 = arith.constant 0 : index
    %c0_10 = arith.constant 0 : index
    %25 = vector.load %arg4[%c0_9, %c0_10] : memref<32x96xf32, #tpu.memory_space<vmem>>, vector<32x96xf32>
    %cst_11 = arith.constant dense<0.000000e+00> : vector<16x96xf32>
    %26 = tpu.matmul %24, %25, %cst_11 {dimension_numbers = #tpu.dot_dimension_numbers<[1], [0], [0], [1], [0, 0, 1, 1], [], []>} : vector<16x32xf32>, vector<32x96xf32>, vector<16x96xf32> -> vector<16x96xf32>
    %c0_12 = arith.constant 0 : index
    %c0_13 = arith.constant 0 : index
    %27 = vector.load %arg5[%c0_12, %c0_13] : memref<1x96xf32, #tpu.memory_space<vmem>>, vector<1x96xf32>
    %28 = vector.broadcast %27 : vector<1x96xf32> to vector<16x96xf32>
    %29 = arith.addf %26, %28 : vector<16x96xf32>
    %c0_14 = arith.constant 0 : index
    %c0_15 = arith.constant 0 : index
    %30 = vector.load %arg6[%c0_14, %c0_15] : memref<16x96xf32, #tpu.memory_space<vmem>>, vector<16x96xf32>
    tpu.vector_store %arg6[%c0_14, %c0_15], %29 {strides = array<i32>} : memref<16x96xf32, #tpu.memory_space<vmem>>, vector<16x96xf32>,
    return
  }
  func.func @transform_0(%arg0: i32) -> (i32, i32) {
    %c0_i32 = arith.constant 0 : i32
    %c0_i32_0 = arith.constant 0 : i32
    return %arg0, %c0_i32 : i32, i32
  }
  func.func @transform_1(%arg0: i32) -> (i32, i32) {
    %c0_i32 = arith.constant 0 : i32
    %c0_i32_0 = arith.constant 0 : i32
    %c0_i32_1 = arith.constant 0 : i32
    return %c0_i32, %c0_i32_0 : i32, i32
  }
  func.func @transform_2(%arg0: i32) -> (i32, i32) {
    %c0_i32 = arith.constant 0 : i32
    %c0_i32_0 = arith.constant 0 : i32
    %c0_i32_1 = arith.constant 0 : i32
    return %c0_i32, %c0_i32_0 : i32, i32
  }
  func.func @transform_3(%arg0: i32) -> (i32, i32) {
    %c0_i32 = arith.constant 0 : i32
    %c0_i32_0 = arith.constant 0 : i32
    %c0_i32_1 = arith.constant 0 : i32
    return %c0_i32, %c0_i32_0 : i32, i32
  }
  func.func @transform_4(%arg0: i32) -> (i32, i32) {
    %c0_i32 = arith.constant 0 : i32
    %c0_i32_0 = arith.constant 0 : i32
    %c0_i32_1 = arith.constant 0 : i32
    return %c0_i32, %c0_i32_0 : i32, i32
  }
  func.func @transform_5(%arg0: i32) -> (i32, i32) {
    %c0_i32 = arith.constant 0 : i32
    %c0_i32_0 = arith.constant 0 : i32
    return %arg0, %c0_i32 : i32, i32
  }
}

</mosaic_0001>

<llo_original>
// kernel: tpu_custom_call.1
$region0: #{tpu_custom_call.1}
  #allocation0 [shape = 'u32[]', space=smem, size = 0x4, offset = 0x4, fixed_abs, tag = 'smem constant byte address 0x4 - core index']
  #allocation1 [shape = 'u32[72,128]{1,0:T(1,128)}', space=vmem, size = 0x9000, scoped, tag = 'internal scratch']
  %s0 = inlined_call_operand.hbm [shape: f32[16,32], index: 0, kind: input, shape index: {}]
  %s1 = inlined_call_operand.hbm [shape: f32[1,32], index: 1, kind: input, shape index: {}]
  %s2 = inlined_call_operand.vmem [shape: f32[1,32], index: 2, kind: input, shape index: {}]
  %s3 = inlined_call_operand.hbm [shape: f32[32,96], index: 3, kind: input, shape index: {}]
  %s4 = inlined_call_operand.vmem [shape: f32[1,96], index: 4, kind: input, shape index: {}]
  %s5 = inlined_call_operand.hbm [shape: f32[16,96], index: 5, kind: output, shape index: {}]
  %s6 = sld [smem:[#allocation0]]
  $region42: #{tpu_custom_call.1} parent=0
    _
  %s8 = ssub.s32 1, %s6
  %s9 = scalar_select 0, %s8, %s6
  $region1: #{tpu_custom_call.1} parent=0
    #allocation2 [shape = 'u8[8192]{0}', space=vmem, size = 0x2000, scoped, tag = 'input window, operand 0, single buffered']
    #allocation3 [shape = 's32[1]{0}', space=sflag, size = 0x4, scoped, tag = 'scoped memory for tpu_custom_call.1']
    #allocation4 [shape = 's32[1]{0}', space=sflag, size = 0x4, scoped, tag = 'scoped memory for tpu_custom_call.1']
    #allocation5 [shape = 'u8[512]{0}', space=vmem, size = 0x400, scoped, tag = 'input window, operand 1, single buffered']
    #allocation6 [shape = 's32[1]{0}', space=sflag, size = 0x4, scoped, tag = 'scoped memory for tpu_custom_call.1']
    #allocation7 [shape = 'u8[16384]{0}', space=vmem, size = 0x4000, scoped, tag = 'input window, operand 3, single buffered']
    #allocation8 [shape = 'u8[8192]{0}', space=vmem, size = 0x2000, scoped, tag = 'output window, operand 0, single buffered']
    %10 = vsyncpa [#allocation3], 0
    %11 = vsyncpa [#allocation6], 0
    %12 = vsyncpa [#allocation4], 0
    // Predicated region
    $region2: #{tpu_custom_call.1} parent=1 // pred_check
      _
    $region3: #{tpu_custom_call.1} parent=1 // pred_check_branch
      %14 = sbr.rel (0) target = $region5
    $region4: #{tpu_custom_call.1} parent=1 // pred_region
      %16 = vsyncadd [#allocation3], 0
      %s17 = sshll.u32 %s0, 4
      %s18 = int_to_ptr.hbm [resolvable:$true] %s17
      %s19 = sshll.u32 [#allocation2], 4
      %s20 = int_to_ptr.vmem [resolvable:$true] %s19
      %25 = dma.hbm_to_vmem [thread:$0]  %s18, 256, %s20, [#allocation3], 128, 128, 8
    $region5: #{tpu_custom_call.1} parent=1 // pred_fallthru
      _
    // Predicated region
    $region6: #{tpu_custom_call.1} parent=1 // pred_check
      _
    $region7: #{tpu_custom_call.1} parent=1 // pred_check_branch
      %27 = sbr.rel (0) target = $region9
    $region8: #{tpu_custom_call.1} parent=1 // pred_region
      %29 = vsyncadd [#allocation6], 0
      %s31 = sshll.u32 %s1, 4
      %s32 = int_to_ptr.hbm [resolvable:$true] %s31
      %s33 = sshll.u32 [#allocation5], 4
      %s34 = int_to_ptr.vmem [resolvable:$true] %s33
      %36 = dma.hbm_to_vmem [thread:$0]  %s32, 16, %s34, [#allocation6]
    $region9: #{tpu_custom_call.1} parent=1 // pred_fallthru
      _
    // Predicated region
    $region10: #{tpu_custom_call.1} parent=1 // pred_check
      _
    $region11: #{tpu_custom_call.1} parent=1 // pred_check_branch
      %38 = sbr.rel (0) target = $region13
    $region12: #{tpu_custom_call.1} parent=1 // pred_region
      _
    $region13: #{tpu_custom_call.1} parent=1 // pred_fallthru
      _
    // Predicated region
    $region14: #{tpu_custom_call.1} parent=1 // pred_check
      _
    $region15: #{tpu_custom_call.1} parent=1 // pred_check_branch
      %40 = sbr.rel (0) target = $region17
    $region16: #{tpu_custom_call.1} parent=1 // pred_region
      %42 = vsyncadd [#allocation6], 0
      %s43 = sshll.u32 %s3, 4
      %s44 = int_to_ptr.hbm [resolvable:$true] %s43
      %s45 = sshll.u32 [#allocation7], 4
      %s46 = int_to_ptr.vmem [resolvable:$true] %s45
      %51 = dma.hbm_to_vmem [thread:$0]  %s44, 512, %s46, [#allocation6], 128, 128, 8
    $region17: #{tpu_custom_call.1} parent=1 // pred_fallthru
      _
    // Predicated region
    $region18: #{tpu_custom_call.1} parent=1 // pred_check
      _
    $region19: #{tpu_custom_call.1} parent=1 // pred_check_branch
      %53 = sbr.rel (0) target = $region21
    $region20: #{tpu_custom_call.1} parent=1 // pred_region
      _
    $region21: #{tpu_custom_call.1} parent=1 // pred_fallthru
      _
    // Predicated region
    $region22: #{tpu_custom_call.1} parent=1 // pred_check
      _
    $region23: #{tpu_custom_call.1} parent=1 // pred_check_branch
      %55 = sbr.rel (0) target = $region25
    $region24: #{tpu_custom_call.1} parent=1 // pred_region
      %57 = dma.done [#allocation3], 256
    $region25: #{tpu_custom_call.1} parent=1 // pred_fallthru
      _
    // Predicated region
    $region26: #{tpu_custom_call.1} parent=1 // pred_check
      _
    $region27: #{tpu_custom_call.1} parent=1 // pred_check_branch
      %59 = sbr.rel (0) target = $region29
    $region28: #{tpu_custom_call.1} parent=1 // pred_region
      %61 = dma.done [#allocation6], 16
    $region29: #{tpu_custom_call.1} parent=1 // pred_fallthru
      _
    // Predicated region
    $region30: #{tpu_custom_call.1} parent=1 // pred_check
      _
    $region31: #{tpu_custom_call.1} parent=1 // pred_check_branch
      %63 = sbr.rel (0) target = $region33
    $region32: #{tpu_custom_call.1} parent=1 // pred_region
      %65 = dma.done [#allocation6], 512
    $region33: #{tpu_custom_call.1} parent=1 // pred_fallthru
      _
    %v66 = vld [vmem:[#allocation2] sm:$0xff]
    %v67 = vld [vmem:[#allocation2 + $0x8] sm:$0xff]
    %vm68 = vcmask 261120
    %v69 = vsel %vm68, %v66, 0.0
    %70 = vadd.xlane.f32.xlu0 %v69
    %v71 = vpop.xlane.xlu0 %70
    %v72 = vsel %vm68, %v67, 0.0
    %73 = vadd.xlane.f32.xlu0 %v72
    %v74 = vpop.xlane.xlu0 %73
    %v75 = vrcp.pop 32.0
    %v76 = vmul.f32 32.0, %v75
    %v77 = vsub.f32 1.0, %v76
    %v78 = vmul.f32 %v75, %v77
    %v79 = vadd.f32 %v75, %v78
    %vm80 = vweird.f32 %v75
    %v81 = vsel %vm80, %v75, %v79
    %v82 = vmul.f32 %v71, %v81
    %v83 = vmul.f32 %v74, %v81
    %v84 = vsub.f32 %v66, %v82
    %v85 = vsub.f32 %v67, %v83
    %v86 = vmul.f32 %v84, %v84
    %v87 = vmul.f32 %v85, %v85
    %v88 = vsel %vm68, %v86, 0.0
    %89 = vadd.xlane.f32.xlu0 %v88
    %v90 = vpop.xlane.xlu0 %89
    %v91 = vsel %vm68, %v87, 0.0
    %92 = vadd.xlane.f32.xlu0 %v91
    %v93 = vpop.xlane.xlu0 %92
    %v94 = vmul.f32 %v90, %v81
    %v95 = vmul.f32 %v93, %v81
    %v96 = vadd.f32 %v94, 1e-05
    %v97 = vadd.f32 %v95, 1e-05
    %v98 = vrsqrt.pop %v96
    %v99 = vmul.f32 %v98, %v96
    %v100 = vmul.f32 %v99, %v98
    %v101 = vmul.f32 0.5, %v100
    %v102 = vsub.f32 1.5, %v101
    %v103 = vmul.f32 %v98, %v102
    %vm104 = vweird.f32 %v96
    %vm105 = vweird.f32 %v98
    %vm106 = vmor %vm104, %vm105
    %v107 = vsel %vm106, %v98, %v103
    %v108 = vrsqrt.pop %v97
    %v109 = vmul.f32 %v108, %v97
    %v110 = vmul.f32 %v109, %v108
    %v111 = vmul.f32 0.5, %v110
    %v112 = vsub.f32 1.5, %v111
    %v113 = vmul.f32 %v108, %v112
    %vm114 = vweird.f32 %v97
    %vm115 = vweird.f32 %v108
    %vm116 = vmor %vm114, %vm115
    %v117 = vsel %vm116, %v108, %v113
    %v118 = vmul.f32 %v84, %v107
    %v119 = vmul.f32 %v85, %v117
    %v120 = vld [vmem:[#allocation5] sm:$0x1]
    %v122 = vperm.slane %v120, 0
    %v124 = vmul.f32 %v118, %v122
    %v125 = vmul.f32 %v119, %v122
    %v126 = vld [vmem:[%s2] sm:$0x1]
    %v128 = vperm.slane %v126, 0
    %v130 = vadd.f32 %v124, %v128
    %v131 = vadd.f32 %v125, %v128
    %v132 = vld [vmem:[#allocation7] sm:$0xff]
    %v133 = vld [vmem:[#allocation7 + $0x8] sm:$0xff]
    %v134 = vld [vmem:[#allocation7 + $0x10] sm:$0xff]
    %v135 = vld [vmem:[#allocation7 + $0x18] sm:$0xff]
    %v136 = vld [vmem:[%s4] sm:$0x1]
    %v138 = vperm.slane %v136, 0
    %v141 = vsel %vm68, %v130, 0
    %v144 = vsel %vm68, %v131, 0
    %146 = vmatpush.msra.mxu0 0.0
    %147 = vmatpush.msra.mxu0 0.0
    %148 = vmatpush.msra.mxu0 0.0
    %149 = vmatpush.msra.mxu0 0.0
    %150 = vmatpush.msra.mxu0 0.0
    %151 = vmatpush.msra.mxu0 0.0
    %152 = vmatpush.msra.mxu0 0.0
    %153 = vmatpush.msra.mxu0 0.0
    %154 = vmatpush.msra.mxu0 0.0
    %155 = vmatpush.msra.mxu0 0.0
    %156 = vmatpush.msra.mxu0 0.0
    %157 = vmatpush.msra.mxu0 0.0
    %158 = vmatpush.msra.mxu0 %v135
    %159 = vmatpush.msra.mxu0 %v134
    %160 = vmatpush.msra.mxu0 %v133
    %161 = vmatpush.msra.mxu0 %v132
    %162 = vmatmul.f32.gmra.mxu0 %v141
    %v163 = vpop.f32.mrf.mxu0
    %v164 = vadd.f32 %v138, %v163
    %165 = vmatmul.f32.gmra.mxu0 %v144
    %v166 = vpop.f32.mrf.mxu0
    %v167 = vadd.f32 %v138, %v166
    %168 = vdwg.mxu0
    %vm169 = vcmask 785408
    %170 = vst.msk [vmem:[#allocation8] sm:$0xff] %vm169, %v164
    %171 = vst.msk [vmem:[#allocation8 + $0x8] sm:$0xff] %vm169, %v167
    // Predicated region
    $region34: #{tpu_custom_call.1} parent=1 // pred_check
      _
    $region35: #{tpu_custom_call.1} parent=1 // pred_check_branch
      %173 = sbr.rel (0) target = $region37
    $region36: #{tpu_custom_call.1} parent=1 // pred_region
      %175 = vsyncadd [#allocation4], 0
      %s176 = sshll.u32 [#allocation8], 4
      %s177 = int_to_ptr.vmem [resolvable:$true] %s176
      %s178 = sshll.u32 %s5, 4
      %s179 = int_to_ptr.hbm [resolvable:$true] %s178
      %184 = dma.vmem_to_hbm [thread:$0]  %s177, 256, %s179, [#allocation4], 128, 128, 8
    $region37: #{tpu_custom_call.1} parent=1 // pred_fallthru
      _
    // Predicated region
    $region38: #{tpu_custom_call.1} parent=1 // pred_check
      _
    $region39: #{tpu_custom_call.1} parent=1 // pred_check_branch
      %186 = sbr.rel (0) target = $region41
    $region40: #{tpu_custom_call.1} parent=1 // pred_region
      %188 = dma.done [#allocation4], 256
    $region41: #{tpu_custom_call.1} parent=1 // pred_fallthru
      _
    %189 = vsyncpa [#allocation3], 1
    %190 = vsyncpa [#allocation6], 1
    %191 = vsyncpa [#allocation4], 1

</llo_original>
